<compile_context>
chip_gen: v7x
topology: tpu7x:2x2x1
jax: 0.10.0
libtpu: 0.0.40
codegen_flags: <defaults>
</compile_context>

<pallas_src>
import jax
import jax.numpy as jnp
from jax.experimental import pallas as pl
from jax.experimental.pallas import tpu as pltpu


_SQRT_HALF = 0.7071067811865476


def _gelu_exact(x):
    # nn.GELU() default: 0.5 * x * (1 + erf(x / sqrt(2))); kept in f32.
    return 0.5 * x * (1.0 + jax.lax.erf(x * _SQRT_HALF))


def _round_up(x, m):
    return ((x + m - 1) // m) * m


def _vmem_budget_bytes():
    """Generation-aware scoped-VMEM budget with headroom."""
    cap = 64 * 1024 * 1024  # assume the smallest physical VMEM (v7x per-TC)
    try:
        info = pltpu.get_tpu_info()
        cap = int(getattr(info, "vmem_capacity_bytes", cap))
    except Exception:
        pass
    return min((cap * 3) // 4, 100 * 1024 * 1024)


# ---------------------------------------------------------------------------
# Path A: weight-resident kernel.  1-D grid over token tiles; W1/W2/biases use
# constant index_maps so they stay in VMEM and are fetched from HBM once.
# No reduction axis -> no accumulator, no init/finalize.
# ---------------------------------------------------------------------------
def ffn_resident_kernel(x_ref, w1_ref, b1_ref, w2_ref, b2_ref, o_ref):
    h = jnp.dot(x_ref[...], w1_ref[...], preferred_element_type=jnp.float32)
    h = _gelu_exact(h + b1_ref[...])
    y = jnp.dot(h.astype(w2_ref.dtype), w2_ref[...],
                preferred_element_type=jnp.float32)
    # Dropout: eval-mode identity.
    # TODO(synk): training-mode dropout would need pltpu.prng_* masking.
    o_ref[...] = (y + b2_ref[...]).astype(o_ref.dtype)


# ---------------------------------------------------------------------------
# Path B: reduction-tiled kernel for intermediate sizes whose weights do not
# fit VMEM.  2-D grid (token tiles, intermediate tiles); reduction axis last
# with a resident f32 VMEM accumulator.
# ---------------------------------------------------------------------------
def ffn_tiled_kernel(x_ref, w1_ref, b1_ref, w2_ref, b2_ref, o_ref, acc_ref):
    j = pl.program_id(1)

    @pl.when(j == 0)
    def _init():
        acc_ref[...] = jnp.zeros_like(acc_ref)

    h = jnp.dot(x_ref[...], w1_ref[...], preferred_element_type=jnp.float32)
    h = _gelu_exact(h + b1_ref[...])
    acc_ref[...] += jnp.dot(h.astype(w2_ref.dtype), w2_ref[...],
                            preferred_element_type=jnp.float32)

    @pl.when(j == pl.num_programs(1) - 1)
    def _finish():
        # Dropout: eval-mode identity.
        o_ref[...] = (acc_ref[...] + b2_ref[...]).astype(o_ref.dtype)


def custom_feed_forward(x, w1, b1, w2, b2, *, compute_dtype=jnp.bfloat16,
                        tm=None, force_tiled=False):
    """FNet-style FFN, eval mode.  x: [B,S,H]; w1: [H,I]; b1: [I]; w2: [I,H]; b2: [H]."""
    B, S, H = x.shape
    I = w1.shape[1]
    BS = B * S
    out_dtype = x.dtype
    cs = jnp.dtype(compute_dtype).itemsize
    osz = jnp.dtype(out_dtype).itemsize

    # Lane-/sublane-friendly padded extents.
    H_p = _round_up(H, 128)
    I_full = _round_up(I, 128)
    if tm is None:
        tm = min(256, _round_up(BS, 8))
    BS_p = _round_up(BS, tm)

    budget = _vmem_budget_bytes()

    # Per-grid-step VMEM footprint estimates (streamed operands double-buffered,
    # f32 intermediates) for path selection.
    act_bytes = 2 * tm * H_p * cs + 2 * tm * H_p * osz          # x / out tiles
    resident_bytes = (2 * 2 * H_p * I_full * cs                 # W1 + W2
                      + 2 * (I_full + H_p) * 4                  # biases
                      + act_bytes
                      + tm * I_full * 4)                        # h intermediate
    use_resident = (not force_tiled) and resident_bytes <= budget

    if use_resident:
        I_pad = I_full
        ti = I_full
    else:
        ti = 128
        for cand in (2048, 1024, 512, 256, 128):
            c = min(cand, I_full)
            tiled_bytes = (2 * 2 * H_p * c * cs                 # W1/W2 blocks
                           + 2 * (c + H_p) * 4                  # biases
                           + act_bytes
                           + tm * H_p * 4                       # f32 accumulator
                           + tm * c * 4)                        # h intermediate
            if tiled_bytes <= budget:
                ti = c
                break
        I_pad = _round_up(I, ti)

    # Zero-pad: padded rows/cols contribute zero to both GEMMs (GELU(0)=0 and
    # zero W2 rows), and padded outputs are sliced off -> semantics preserved.
    x2 = jnp.pad(x.reshape(BS, H).astype(compute_dtype),
                 ((0, BS_p - BS), (0, H_p - H)))
    w1p = jnp.pad(w1.astype(compute_dtype), ((0, H_p - H), (0, I_pad - I)))
    w2p = jnp.pad(w2.astype(compute_dtype), ((0, I_pad - I), (0, H_p - H)))
    b1p = jnp.pad(b1.astype(jnp.float32), (0, I_pad - I)).reshape(1, I_pad)
    b2p = jnp.pad(b2.astype(jnp.float32), (0, H_p - H)).reshape(1, H_p)

    cost = pl.CostEstimate(
        flops=4 * BS * H * I,
        transcendentals=BS * I,
        bytes_accessed=(x.size + w1.size + w2.size) * cs
                       + (b1.size + b2.size) * 4 + BS * H * osz)

    cparams = pltpu.CompilerParams(
        dimension_semantics=(("parallel",) if use_resident
                             else ("parallel", "arbitrary")),
        vmem_limit_bytes=int(budget))

    if use_resident:
        out = pl.pallas_call(
            ffn_resident_kernel,
            out_shape=jax.ShapeDtypeStruct((BS_p, H_p), out_dtype),
            grid_spec=pltpu.PrefetchScalarGridSpec(
                num_scalar_prefetch=0,
                grid=(BS_p // tm,),
                in_specs=[
                    pl.BlockSpec((tm, H_p), lambda i: (i, 0)),      # x tile
                    pl.BlockSpec((H_p, I_pad), lambda i: (0, 0)),   # W1 resident
                    pl.BlockSpec((1, I_pad), lambda i: (0, 0)),     # b1 resident
                    pl.BlockSpec((I_pad, H_p), lambda i: (0, 0)),   # W2 resident
                    pl.BlockSpec((1, H_p), lambda i: (0, 0)),       # b2 resident
                ],
                out_specs=pl.BlockSpec((tm, H_p), lambda i: (i, 0)),
            ),
            compiler_params=cparams,
            cost_estimate=cost,
        )(x2, w1p, b1p, w2p, b2p)
    else:
        out = pl.pallas_call(
            ffn_tiled_kernel,
            out_shape=jax.ShapeDtypeStruct((BS_p, H_p), out_dtype),
            grid_spec=pltpu.PrefetchScalarGridSpec(
                num_scalar_prefetch=0,
                grid=(BS_p // tm, I_pad // ti),
                in_specs=[
                    pl.BlockSpec((tm, H_p), lambda i, j: (i, 0)),   # x tile
                    pl.BlockSpec((H_p, ti), lambda i, j: (0, j)),   # W1 col block
                    pl.BlockSpec((1, ti), lambda i, j: (0, j)),     # b1 block
                    pl.BlockSpec((ti, H_p), lambda i, j: (j, 0)),   # W2 row block
                    pl.BlockSpec((1, H_p), lambda i, j: (0, 0)),    # b2 resident
                ],
                out_specs=pl.BlockSpec((tm, H_p), lambda i, j: (i, 0)),
                scratch_shapes=[pltpu.VMEM((tm, H_p), jnp.float32)],
            ),
            compiler_params=cparams,
            cost_estimate=cost,
        )(x2, w1p, b1p, w2p, b2p)

    return out[:BS, :H].reshape(B, S, H)


def _reference(x, w1, b1, w2, b2):
    h = jnp.dot(x, w1) + b1
    h = 0.5 * h * (1.0 + jax.lax.erf(h * _SQRT_HALF))
    return jnp.dot(h, w2) + b2


if __name__ == "__main__":
    # Small synthetic config consistent with the module's __init__.
    B, S = 2, 16
    hidden_size = 128
    intermediate_size = 256
    # hidden_dropout_prob only applies in training; forward here is eval-mode.

    key = jax.random.PRNGKey(0)
    kx, kw1, kb1, kw2, kb2 = jax.random.split(key, 5)

    x = jax.random.normal(kx, (B, S, hidden_size), jnp.float32)
    w1 = 0.02 * jax.random.normal(kw1, (hidden_size, intermediate_size), jnp.float32)
    b1 = 0.02 * jax.random.normal(kb1, (intermediate_size,), jnp.float32)
    w2 = 0.02 * jax.random.normal(kw2, (intermediate_size, hidden_size), jnp.float32)
    b2 = 0.02 * jax.random.normal(kb2, (hidden_size,), jnp.float32)

    ref = _reference(x, w1, b1, w2, b2)

    # Weight-resident path (expected here: the whole problem is ~200 KB, so a
    # single grid point with everything resident beats any tiling).
    out = jax.block_until_ready(custom_feed_forward(x, w1, b1, w2, b2))
    assert out.shape == (B, S, hidden_size)
    assert jnp.allclose(out, ref, atol=5e-3, rtol=5e-2), "resident path mismatch"

    # Reduction-tiled fallback (used when weights exceed the VMEM budget).
    out_t = jax.block_until_ready(
        custom_feed_forward(x, w1, b1, w2, b2, force_tiled=True))
    assert jnp.allclose(out_t, ref, atol=5e-3, rtol=5e-2), "tiled path mismatch"

    print("KERNEL_OK")
</pallas_src>

<mosaic_0001>
module attributes {stable_mosaic.version = 11 : i64} {
  func.func @ffn_resident_kernel(%arg0: i32, %arg1: memref<32x128xbf16, #tpu.memory_space<vmem>>, %arg2: memref<128x256xbf16, #tpu.memory_space<vmem>>, %arg3: memref<1x256xf32, #tpu.memory_space<vmem>>, %arg4: memref<256x128xbf16, #tpu.memory_space<vmem>>, %arg5: memref<1x128xf32, #tpu.memory_space<vmem>>, %arg6: memref<32x128xf32, #tpu.memory_space<vmem>>) attributes {dimension_semantics = [#tpu.dimension_semantics<parallel>], iteration_bounds = array<i64: 1>, scalar_prefetch = 0 : i64, scratch_operands = 0 : i64, tpu.core_type = #tpu.core_type<tc>, window_params = [{transform_indices = @transform_0, window_bounds = array<i64: 32, 128>}, {pipeline_mode = #tpu.pipeline_mode<synchronous>, transform_indices = @transform_1, window_bounds = array<i64: 128, 256>}, {pipeline_mode = #tpu.pipeline_mode<synchronous>, transform_indices = @transform_2, window_bounds = array<i64: 1, 256>}, {pipeline_mode = #tpu.pipeline_mode<synchronous>, transform_indices = @transform_3, window_bounds = array<i64: 256, 128>}, {pipeline_mode = #tpu.pipeline_mode<synchronous>, transform_indices = @transform_4, window_bounds = array<i64: 1, 128>}, {transform_indices = @transform_5, window_bounds = array<i64: 32, 128>}]} {
    %c0 = arith.constant 0 : index
    %c0_0 = arith.constant 0 : index
    %0 = vector.load %arg1[%c0, %c0_0] : memref<32x128xbf16, #tpu.memory_space<vmem>>, vector<32x128xbf16>
    %c0_1 = arith.constant 0 : index
    %c0_2 = arith.constant 0 : index
    %1 = vector.load %arg2[%c0_1, %c0_2] : memref<128x256xbf16, #tpu.memory_space<vmem>>, vector<128x256xbf16>
    %cst = arith.constant dense<0.000000e+00> : vector<32x256xf32>
    %2 = tpu.matmul %0, %1, %cst {dimension_numbers = #tpu.dot_dimension_numbers<[1], [0], [0], [1], [0, 0, 1, 1], [], []>} : vector<32x128xbf16>, vector<128x256xbf16>, vector<32x256xf32> -> vector<32x256xf32>
    %c0_3 = arith.constant 0 : index
    %c0_4 = arith.constant 0 : index
    %3 = vector.load %arg3[%c0_3, %c0_4] : memref<1x256xf32, #tpu.memory_space<vmem>>, vector<1x256xf32>
    %4 = vector.broadcast %3 : vector<1x256xf32> to vector<32x256xf32>
    %5 = arith.addf %2, %4 : vector<32x256xf32>
    %cst_5 = arith.constant 5.000000e-01 : f32
    %6 = vector.broadcast %cst_5 : f32 to vector<32x256xf32>
    %7 = arith.mulf %6, %5 : vector<32x256xf32>
    %cst_6 = arith.constant 0.707106769 : f32
    %8 = vector.broadcast %cst_6 : f32 to vector<32x256xf32>
    %9 = arith.mulf %5, %8 : vector<32x256xf32>
    %10 = math.erf %9 : vector<32x256xf32>
    %cst_7 = arith.constant 1.000000e+00 : f32
    %11 = vector.broadcast %cst_7 : f32 to vector<32x256xf32>
    %12 = arith.addf %11, %10 : vector<32x256xf32>
    %13 = arith.mulf %7, %12 : vector<32x256xf32>
    %14 = arith.truncf %13 : vector<32x256xf32> to vector<32x256xbf16>
    %c0_8 = arith.constant 0 : index
    %c0_9 = arith.constant 0 : index
    %15 = vector.load %arg4[%c0_8, %c0_9] : memref<256x128xbf16, #tpu.memory_space<vmem>>, vector<256x128xbf16>
    %cst_10 = arith.constant dense<0.000000e+00> : vector<32x128xf32>
    %16 = tpu.matmul %14, %15, %cst_10 {dimension_numbers = #tpu.dot_dimension_numbers<[1], [0], [0], [1], [0, 0, 1, 1], [], []>} : vector<32x256xbf16>, vector<256x128xbf16>, vector<32x128xf32> -> vector<32x128xf32>
    %c0_11 = arith.constant 0 : index
    %c0_12 = arith.constant 0 : index
    %17 = vector.load %arg5[%c0_11, %c0_12] : memref<1x128xf32, #tpu.memory_space<vmem>>, vector<1x128xf32>
    %18 = vector.broadcast %17 : vector<1x128xf32> to vector<32x128xf32>
    %19 = arith.addf %16, %18 : vector<32x128xf32>
    %c0_13 = arith.constant 0 : index
    %c0_14 = arith.constant 0 : index
    %20 = vector.load %arg6[%c0_13, %c0_14] : memref<32x128xf32, #tpu.memory_space<vmem>>, vector<32x128xf32>
    tpu.vector_store %arg6[%c0_13, %c0_14], %19 {strides = array<i32>} : memref<32x128xf32, #tpu.memory_space<vmem>>, vector<32x128xf32>,
    return
  }
  func.func @transform_0(%arg0: i32) -> (i32, i32) {
    %c0_i32 = arith.constant 0 : i32
    %c0_i32_0 = arith.constant 0 : i32
    return %arg0, %c0_i32 : i32, i32
  }
  func.func @transform_1(%arg0: i32) -> (i32, i32) {
    %c0_i32 = arith.constant 0 : i32
    %c0_i32_0 = arith.constant 0 : i32
    %c0_i32_1 = arith.constant 0 : i32
    return %c0_i32, %c0_i32_0 : i32, i32
  }
  func.func @transform_2(%arg0: i32) -> (i32, i32) {
    %c0_i32 = arith.constant 0 : i32
    %c0_i32_0 = arith.constant 0 : i32
    %c0_i32_1 = arith.constant 0 : i32
    return %c0_i32, %c0_i32_0 : i32, i32
  }
  func.func @transform_3(%arg0: i32) -> (i32, i32) {
    %c0_i32 = arith.constant 0 : i32
    %c0_i32_0 = arith.constant 0 : i32
    %c0_i32_1 = arith.constant 0 : i32
    return %c0_i32, %c0_i32_0 : i32, i32
  }
  func.func @transform_4(%arg0: i32) -> (i32, i32) {
    %c0_i32 = arith.constant 0 : i32
    %c0_i32_0 = arith.constant 0 : i32
    %c0_i32_1 = arith.constant 0 : i32
    return %c0_i32, %c0_i32_0 : i32, i32
  }
  func.func @transform_5(%arg0: i32) -> (i32, i32) {
    %c0_i32 = arith.constant 0 : i32
    %c0_i32_0 = arith.constant 0 : i32
    return %arg0, %c0_i32 : i32, i32
  }
}

</mosaic_0001>

<llo_original>
// kernel: tpu_custom_call.1
$region0: #{tpu_custom_call.1}
  #allocation0 [shape = 'u32[]', space=smem, size = 0x4, offset = 0x4, fixed_abs, tag = 'smem constant byte address 0x4 - core index']
  #allocation1 [shape = 'u32[144,128]{1,0:T(1,128)}', space=vmem, size = 0x12000, scoped, tag = 'internal scratch']
  %s0 = inlined_call_operand.hbm [shape: bf16[32,128], index: 0, kind: input, shape index: {}]
  %s1 = inlined_call_operand.hbm [shape: bf16[128,256], index: 1, kind: input, shape index: {}]
  %s2 = inlined_call_operand.vmem [shape: f32[1,256], index: 2, kind: input, shape index: {}]
  %s3 = inlined_call_operand.hbm [shape: bf16[256,128], index: 3, kind: input, shape index: {}]
  %s4 = inlined_call_operand.vmem [shape: f32[1,128], index: 4, kind: input, shape index: {}]
  %s5 = inlined_call_operand.hbm [shape: f32[32,128], index: 5, kind: output, shape index: {}]
  %s6 = sld [smem:[#allocation0]]
  $region42: #{tpu_custom_call.1} parent=0
    _
  %s8 = ssub.s32 1, %s6
  %s9 = scalar_select 0, %s8, %s6
  $region1: #{tpu_custom_call.1} parent=0
    #allocation2 [shape = 'u8[8192]{0}', space=vmem, size = 0x2000, scoped, tag = 'input window, operand 0, single buffered']
    #allocation3 [shape = 's32[1]{0}', space=sflag, size = 0x4, scoped, tag = 'scoped memory for tpu_custom_call.1']
    #allocation4 [shape = 's32[1]{0}', space=sflag, size = 0x4, scoped, tag = 'scoped memory for tpu_custom_call.1']
    #allocation5 [shape = 'u8[65536]{0}', space=vmem, size = 0x10000, scoped, tag = 'input window, operand 1, single buffered']
    #allocation6 [shape = 's32[1]{0}', space=sflag, size = 0x4, scoped, tag = 'scoped memory for tpu_custom_call.1']
    #allocation7 [shape = 'u8[65536]{0}', space=vmem, size = 0x10000, scoped, tag = 'input window, operand 3, single buffered']
    #allocation8 [shape = 'u8[16384]{0}', space=vmem, size = 0x4000, scoped, tag = 'output window, operand 0, single buffered']
    %10 = vsyncpa [#allocation3], 0
    %11 = vsyncpa [#allocation6], 0
    %12 = vsyncpa [#allocation4], 0
    // Predicated region
    $region2: #{tpu_custom_call.1} parent=1 // pred_check
      _
    $region3: #{tpu_custom_call.1} parent=1 // pred_check_branch
      %14 = sbr.rel (0) target = $region5
    $region4: #{tpu_custom_call.1} parent=1 // pred_region
      %s16 = ssub.s32 256, 256
      %17 = vsyncadd [#allocation3], %s16
      %s18 = sshll.u32 [#allocation2], 4
      %s19 = int_to_ptr.vmem [resolvable:$true] %s18
      %24 = dma.hbm_to_vmem [thread:$0]  %s0, 256, %s19, [#allocation3], 64, 64, 4
    $region5: #{tpu_custom_call.1} parent=1 // pred_fallthru
      _
    // Predicated region
    $region6: #{tpu_custom_call.1} parent=1 // pred_check
      _
    $region7: #{tpu_custom_call.1} parent=1 // pred_check_branch
      %26 = sbr.rel (0) target = $region9
    $region8: #{tpu_custom_call.1} parent=1 // pred_region
      %s28 = ssub.s32 2048, 2048
      %29 = vsyncadd [#allocation6], %s28
      %s30 = sshll.u32 [#allocation5], 4
      %s31 = int_to_ptr.vmem [resolvable:$true] %s30
      %36 = dma.hbm_to_vmem [thread:$0]  %s1, 2048, %s31, [#allocation6], 128, 128, 8
    $region9: #{tpu_custom_call.1} parent=1 // pred_fallthru
      _
    // Predicated region
    $region10: #{tpu_custom_call.1} parent=1 // pred_check
      _
    $region11: #{tpu_custom_call.1} parent=1 // pred_check_branch
      %38 = sbr.rel (0) target = $region13
    $region12: #{tpu_custom_call.1} parent=1 // pred_region
      _
    $region13: #{tpu_custom_call.1} parent=1 // pred_fallthru
      _
    // Predicated region
    $region14: #{tpu_custom_call.1} parent=1 // pred_check
      _
    $region15: #{tpu_custom_call.1} parent=1 // pred_check_branch
      %40 = sbr.rel (0) target = $region17
    $region16: #{tpu_custom_call.1} parent=1 // pred_region
      %s42 = ssub.s32 2048, 2048
      %43 = vsyncadd [#allocation6], %s42
      %s44 = sshll.u32 [#allocation7], 4
      %s45 = int_to_ptr.vmem [resolvable:$true] %s44
      %50 = dma.hbm_to_vmem [thread:$0]  %s3, 2048, %s45, [#allocation6], 64, 64, 4
    $region17: #{tpu_custom_call.1} parent=1 // pred_fallthru
      _
    // Predicated region
    $region18: #{tpu_custom_call.1} parent=1 // pred_check
      _
    $region19: #{tpu_custom_call.1} parent=1 // pred_check_branch
      %52 = sbr.rel (0) target = $region21
    $region20: #{tpu_custom_call.1} parent=1 // pred_region
      _
    $region21: #{tpu_custom_call.1} parent=1 // pred_fallthru
      _
    // Predicated region
    $region22: #{tpu_custom_call.1} parent=1 // pred_check
      _
    $region23: #{tpu_custom_call.1} parent=1 // pred_check_branch
      %54 = sbr.rel (0) target = $region25
    $region24: #{tpu_custom_call.1} parent=1 // pred_region
      %55 = dma.done [#allocation3], 256
    $region25: #{tpu_custom_call.1} parent=1 // pred_fallthru
      _
    // Predicated region
    $region26: #{tpu_custom_call.1} parent=1 // pred_check
      _
    $region27: #{tpu_custom_call.1} parent=1 // pred_check_branch
      %57 = sbr.rel (0) target = $region29
    $region28: #{tpu_custom_call.1} parent=1 // pred_region
      %58 = dma.done [#allocation6], 2048
    $region29: #{tpu_custom_call.1} parent=1 // pred_fallthru
      _
    // Predicated region
    $region30: #{tpu_custom_call.1} parent=1 // pred_check
      _
    $region31: #{tpu_custom_call.1} parent=1 // pred_check_branch
      %60 = sbr.rel (0) target = $region33
    $region32: #{tpu_custom_call.1} parent=1 // pred_region
      %61 = dma.done [#allocation6], 2048
    $region33: #{tpu_custom_call.1} parent=1 // pred_fallthru
      _
    %v63 = vld [vmem:[#allocation2] sm:$0xf]
    %v64 = vld [vmem:[#allocation2 + $0x4] sm:$0xf]
    %v65 = vld [vmem:[#allocation2 + $0x8] sm:$0xf]
    %v66 = vld [vmem:[#allocation2 + $0xc] sm:$0xf]
    %v67 = vld [vmem:[#allocation5] sm:$0xff]
    %v68 = vld [vmem:[#allocation5 + $0x8] sm:$0xff]
    %v69 = vld [vmem:[#allocation5 + $0x10] sm:$0xff]
    %v70 = vld [vmem:[#allocation5 + $0x18] sm:$0xff]
    %v71 = vld [vmem:[#allocation5 + $0x20] sm:$0xff]
    %v72 = vld [vmem:[#allocation5 + $0x28] sm:$0xff]
    %v73 = vld [vmem:[#allocation5 + $0x30] sm:$0xff]
    %v74 = vld [vmem:[#allocation5 + $0x38] sm:$0xff]
    %v75 = vld [vmem:[#allocation5 + $0x40] sm:$0xff]
    %v76 = vld [vmem:[#allocation5 + $0x48] sm:$0xff]
    %v77 = vld [vmem:[#allocation5 + $0x50] sm:$0xff]
    %v78 = vld [vmem:[#allocation5 + $0x58] sm:$0xff]
    %v79 = vld [vmem:[#allocation5 + $0x60] sm:$0xff]
    %v80 = vld [vmem:[#allocation5 + $0x68] sm:$0xff]
    %v81 = vld [vmem:[#allocation5 + $0x70] sm:$0xff]
    %v82 = vld [vmem:[#allocation5 + $0x78] sm:$0xff]
    %v83 = vld [vmem:[%s2] sm:$0x3]
    %v85 = vlaneseq
    %v86 = vshrl.u32 %v85, 7
    %v87 = vsub.s32 0, %v86
    %v88 = vrot.slane %v83, %v87
    %v89 = vlaneseq
    %v90 = vshrl.u32 %v89, 7
    %v91 = vsub.s32 1, %v90
    %v92 = vrot.slane %v83, %v91
    %v99 = vunpack.c.l.b16 %v63
    %v100 = vunpack.c.l.b16 %v64
    %v101 = vunpack.c.l.b16 %v65
    %v102 = vunpack.c.l.b16 %v66
    %v103 = vpack.c.b16 %v100, %v99
    %v104 = vpack.c.b16 %v102, %v101
    %v123 = vunpack.c.l.b16 %v67
    %v124 = vunpack.c.h.b16 %v67
    %v125 = vunpack.c.l.b16 %v68
    %v126 = vunpack.c.h.b16 %v68
    %v127 = vunpack.c.l.b16 %v69
    %v128 = vunpack.c.h.b16 %v69
    %v129 = vunpack.c.l.b16 %v70
    %v130 = vunpack.c.h.b16 %v70
    %v131 = vunpack.c.l.b16 %v71
    %v132 = vunpack.c.h.b16 %v71
    %v133 = vunpack.c.l.b16 %v72
    %v134 = vunpack.c.h.b16 %v72
    %v135 = vunpack.c.l.b16 %v73
    %v136 = vunpack.c.h.b16 %v73
    %v137 = vunpack.c.l.b16 %v74
    %v138 = vunpack.c.h.b16 %v74
    %v139 = vunpack.c.l.b16 %v75
    %v140 = vunpack.c.h.b16 %v75
    %v141 = vunpack.c.l.b16 %v76
    %v142 = vunpack.c.h.b16 %v76
    %v143 = vunpack.c.l.b16 %v77
    %v144 = vunpack.c.h.b16 %v77
    %v145 = vunpack.c.l.b16 %v78
    %v146 = vunpack.c.h.b16 %v78
    %v147 = vunpack.c.l.b16 %v79
    %v148 = vunpack.c.h.b16 %v79
    %v149 = vunpack.c.l.b16 %v80
    %v150 = vunpack.c.h.b16 %v80
    %v151 = vunpack.c.l.b16 %v81
    %v152 = vunpack.c.h.b16 %v81
    %v153 = vunpack.c.l.b16 %v82
    %v154 = vunpack.c.h.b16 %v82
    %v155 = vpack.c.b16 %v125, %v123
    %v156 = vpack.c.b16 %v126, %v124
    %v157 = vpack.c.b16 %v129, %v127
    %v158 = vpack.c.b16 %v130, %v128
    %v159 = vpack.c.b16 %v133, %v131
    %v160 = vpack.c.b16 %v134, %v132
    %v161 = vpack.c.b16 %v137, %v135
    %v162 = vpack.c.b16 %v138, %v136
    %v163 = vpack.c.b16 %v141, %v139
    %v164 = vpack.c.b16 %v142, %v140
    %v165 = vpack.c.b16 %v145, %v143
    %v166 = vpack.c.b16 %v146, %v144
    %v167 = vpack.c.b16 %v149, %v147
    %v168 = vpack.c.b16 %v150, %v148
    %v169 = vpack.c.b16 %v153, %v151
    %v170 = vpack.c.b16 %v154, %v152
    %187 = vmatprep.subr.bf16.mxu0 %v156
    %188 = vmatpush1.bf16.msra.mxu0 %v155
    %189 = vmatprep.subr.bf16.mxu0 %v158
    %190 = vmatpush1.bf16.msra.mxu0 %v157
    %191 = vmatprep.subr.bf16.mxu0 %v160
    %192 = vmatpush1.bf16.msra.mxu0 %v159
    %193 = vmatprep.subr.bf16.mxu0 %v162
    %194 = vmatpush1.bf16.msra.mxu0 %v161
    %195 = vmatprep.subr.bf16.mxu0 %v164
    %196 = vmatpush1.bf16.msra.mxu0 %v163
    %197 = vmatprep.subr.bf16.mxu0 %v166
    %198 = vmatpush1.bf16.msra.mxu0 %v165
    %199 = vmatprep.subr.bf16.mxu0 %v168
    %200 = vmatpush1.bf16.msra.mxu0 %v167
    %201 = vmatprep.subr.bf16.mxu0 %v170
    %202 = vmatpush1.bf16.msra.mxu0 %v169
    %203 = vmatprep.subr.bf16.mxu0 0
    %204 = vmatpush1.bf16.msra.mxu0 0
    %205 = vmatprep.subr.bf16.mxu0 0
    %206 = vmatpush1.bf16.msra.mxu0 0
    %207 = vmatprep.subr.bf16.mxu0 0
    %208 = vmatpush1.bf16.msra.mxu0 0
    %209 = vmatprep.subr.bf16.mxu0 0
    %210 = vmatpush1.bf16.msra.mxu0 0
    %211 = vmatprep.subr.bf16.mxu0 0
    %212 = vmatpush1.bf16.msra.mxu0 0
    %213 = vmatprep.subr.bf16.mxu0 0
    %214 = vmatpush1.bf16.msra.mxu0 0
    %215 = vmatprep.subr.bf16.mxu0 0
    %216 = vmatpush1.bf16.msra.mxu0 0
    %217 = vmatprep.subr.bf16.mxu0 0
    %218 = vmatpush1.bf16.msra.mxu0 0
    %219 = vmatprep.mubr.bf16.mxu0 0
    %220 = vmatmul.mubr.bf16.gmra.mrb[0].mxu0 %v103
    %v221 = vpop.f32.mrb[0].mxu0
    %v222 = vadd.f32 %v88, %v221
    %v223 = vpop.f32.mrb[0].mxu0
    %v224 = vadd.f32 %v92, %v223
    %v225 = vpop.f32.mrb[0].mxu0
    %v226 = vadd.f32 %v88, %v225
    %v227 = vpop.f32.mrb[0].mxu0
    %v228 = vadd.f32 %v92, %v227
    %229 = vmatprep.mubr.bf16.mxu0 0
    %230 = vmatmul.mubr.bf16.gmra.mrb[0].mxu0 %v104
    %v231 = vpop.f32.mrb[0].mxu0
    %v232 = vadd.f32 %v88, %v231
    %v233 = vpop.f32.mrb[0].mxu0
    %v234 = vadd.f32 %v92, %v233
    %v235 = vpop.f32.mrb[0].mxu0
    %v236 = vadd.f32 %v88, %v235
    %v237 = vpop.f32.mrb[0].mxu0
    %v238 = vadd.f32 %v92, %v237
    %239 = vdwg.mxu0
    %v240 = vmul.f32 %v222, 0.5
    %v241 = vmul.f32 %v224, 0.5
    %v242 = vmul.f32 %v226, 0.5
    %v243 = vmul.f32 %v228, 0.5
    %v244 = vmul.f32 %v232, 0.5
    %v245 = vmul.f32 %v234, 0.5
    %v246 = vmul.f32 %v236, 0.5
    %v247 = vmul.f32 %v238, 0.5
    %v248 = vmul.f32 %v222, 0.70710677
    %v249 = vmul.f32 %v224, 0.70710677
    %v250 = vmul.f32 %v226, 0.70710677
    %v251 = vmul.f32 %v228, 0.70710677
    %v252 = vmul.f32 %v232, 0.70710677
    %v253 = vmul.f32 %v234, 0.70710677
    %v254 = vmul.f32 %v236, 0.70710677
    %v255 = vmul.f32 %v238, 0.70710677
    %v256 = verf.f32.pop %v248
    %v257 = verf.f32.pop %v249
    %v258 = verf.f32.pop %v250
    %v259 = verf.f32.pop %v251
    %v260 = verf.f32.pop %v252
    %v261 = verf.f32.pop %v253
    %v262 = verf.f32.pop %v254
    %v263 = verf.f32.pop %v255
    %v264 = vadd.f32 %v256, 1.0
    %v265 = vadd.f32 %v257, 1.0
    %v266 = vadd.f32 %v258, 1.0
    %v267 = vadd.f32 %v259, 1.0
    %v268 = vadd.f32 %v260, 1.0
    %v269 = vadd.f32 %v261, 1.0
    %v270 = vadd.f32 %v262, 1.0
    %v271 = vadd.f32 %v263, 1.0
    %v272 = vmul.f32 %v240, %v264
    %v273 = vmul.f32 %v241, %v265
    %v274 = vmul.f32 %v242, %v266
    %v275 = vmul.f32 %v243, %v267
    %v276 = vmul.f32 %v244, %v268
    %v277 = vmul.f32 %v245, %v269
    %v278 = vmul.f32 %v246, %v270
    %v279 = vmul.f32 %v247, %v271
    %v280 = vpack.c.bf16 %v274, %v272
    %v281 = vpack.c.bf16 %v275, %v273
    %v282 = vpack.c.bf16 %v278, %v276
    %v283 = vpack.c.bf16 %v279, %v277
    %v284 = vld [vmem:[#allocation7] sm:$0xf]
    %v285 = vld [vmem:[#allocation7 + $0x4] sm:$0xf]
    %v286 = vld [vmem:[#allocation7 + $0x8] sm:$0xf]
    %v287 = vld [vmem:[#allocation7 + $0xc] sm:$0xf]
    %v288 = vld [vmem:[#allocation7 + $0x10] sm:$0xf]
    %v289 = vld [vmem:[#allocation7 + $0x14] sm:$0xf]
    %v290 = vld [vmem:[#allocation7 + $0x18] sm:$0xf]
    %v291 = vld [vmem:[#allocation7 + $0x1c] sm:$0xf]
    %v292 = vld [vmem:[#allocation7 + $0x20] sm:$0xf]
    %v293 = vld [vmem:[#allocation7 + $0x24] sm:$0xf]
    %v294 = vld [vmem:[#allocation7 + $0x28] sm:$0xf]
    %v295 = vld [vmem:[#allocation7 + $0x2c] sm:$0xf]
    %v296 = vld [vmem:[#allocation7 + $0x30] sm:$0xf]
    %v297 = vld [vmem:[#allocation7 + $0x34] sm:$0xf]
    %v298 = vld [vmem:[#allocation7 + $0x38] sm:$0xf]
    %v299 = vld [vmem:[#allocation7 + $0x3c] sm:$0xf]
    %v300 = vld [vmem:[#allocation7 + $0x40] sm:$0xf]
    %v301 = vld [vmem:[#allocation7 + $0x44] sm:$0xf]
    %v302 = vld [vmem:[#allocation7 + $0x48] sm:$0xf]
    %v303 = vld [vmem:[#allocation7 + $0x4c] sm:$0xf]
    %v304 = vld [vmem:[#allocation7 + $0x50] sm:$0xf]
    %v305 = vld [vmem:[#allocation7 + $0x54] sm:$0xf]
    %v306 = vld [vmem:[#allocation7 + $0x58] sm:$0xf]
    %v307 = vld [vmem:[#allocation7 + $0x5c] sm:$0xf]
    %v308 = vld [vmem:[#allocation7 + $0x60] sm:$0xf]
    %v309 = vld [vmem:[#allocation7 + $0x64] sm:$0xf]
    %v310 = vld [vmem:[#allocation7 + $0x68] sm:$0xf]
    %v311 = vld [vmem:[#allocation7 + $0x6c] sm:$0xf]
    %v312 = vld [vmem:[#allocation7 + $0x70] sm:$0xf]
    %v313 = vld [vmem:[#allocation7 + $0x74] sm:$0xf]
    %v314 = vld [vmem:[#allocation7 + $0x78] sm:$0xf]
    %v315 = vld [vmem:[#allocation7 + $0x7c] sm:$0xf]
    %v316 = vld [vmem:[%s4] sm:$0x1]
    %v318 = vlaneseq
    %v319 = vshrl.u32 %v318, 7
    %v320 = vsub.s32 0, %v319
    %v321 = vrot.slane %v316, %v320
    %v355 = vunpack.c.l.b16 %v284
    %v356 = vunpack.c.l.b16 %v285
    %v357 = vunpack.c.l.b16 %v286
    %v358 = vunpack.c.l.b16 %v287
    %v359 = vunpack.c.l.b16 %v288
    %v360 = vunpack.c.l.b16 %v289
    %v361 = vunpack.c.l.b16 %v290
    %v362 = vunpack.c.l.b16 %v291
    %v363 = vunpack.c.l.b16 %v292
    %v364 = vunpack.c.l.b16 %v293
    %v365 = vunpack.c.l.b16 %v294
    %v366 = vunpack.c.l.b16 %v295
    %v367 = vunpack.c.l.b16 %v296
    %v368 = vunpack.c.l.b16 %v297
    %v369 = vunpack.c.l.b16 %v298
    %v370 = vunpack.c.l.b16 %v299
    %v371 = vunpack.c.l.b16 %v300
    %v372 = vunpack.c.l.b16 %v301
    %v373 = vunpack.c.l.b16 %v302
    %v374 = vunpack.c.l.b16 %v303
    %v375 = vunpack.c.l.b16 %v304
    %v376 = vunpack.c.l.b16 %v305
    %v377 = vunpack.c.l.b16 %v306
    %v378 = vunpack.c.l.b16 %v307
    %v379 = vunpack.c.l.b16 %v308
    %v380 = vunpack.c.l.b16 %v309
    %v381 = vunpack.c.l.b16 %v310
    %v382 = vunpack.c.l.b16 %v311
    %v383 = vunpack.c.l.b16 %v312
    %v384 = vunpack.c.l.b16 %v313
    %v385 = vunpack.c.l.b16 %v314
    %v386 = vunpack.c.l.b16 %v315
    %v387 = vpack.c.b16 %v356, %v355
    %v388 = vpack.c.b16 %v358, %v357
    %v389 = vpack.c.b16 %v360, %v359
    %v390 = vpack.c.b16 %v362, %v361
    %v391 = vpack.c.b16 %v364, %v363
    %v392 = vpack.c.b16 %v366, %v365
    %v393 = vpack.c.b16 %v368, %v367
    %v394 = vpack.c.b16 %v370, %v369
    %v395 = vpack.c.b16 %v372, %v371
    %v396 = vpack.c.b16 %v374, %v373
    %v397 = vpack.c.b16 %v376, %v375
    %v398 = vpack.c.b16 %v378, %v377
    %v399 = vpack.c.b16 %v380, %v379
    %v400 = vpack.c.b16 %v382, %v381
    %v401 = vpack.c.b16 %v384, %v383
    %v402 = vpack.c.b16 %v386, %v385
    %419 = vmatprep.subr.bf16.mxu0 0
    %420 = vmatpush1.bf16.msra.mxu0 %v387
    %421 = vmatprep.subr.bf16.mxu0 0
    %422 = vmatpush1.bf16.msra.mxu0 %v388
    %423 = vmatprep.subr.bf16.mxu0 0
    %424 = vmatpush1.bf16.msra.mxu0 %v389
    %425 = vmatprep.subr.bf16.mxu0 0
    %426 = vmatpush1.bf16.msra.mxu0 %v390
    %427 = vmatprep.subr.bf16.mxu0 0
    %428 = vmatpush1.bf16.msra.mxu0 %v391
    %429 = vmatprep.subr.bf16.mxu0 0
    %430 = vmatpush1.bf16.msra.mxu0 %v392
    %431 = vmatprep.subr.bf16.mxu0 0
    %432 = vmatpush1.bf16.msra.mxu0 %v393
    %433 = vmatprep.subr.bf16.mxu0 0
    %434 = vmatpush1.bf16.msra.mxu0 %v394
    %435 = vmatprep.subr.bf16.mxu0 0
    %436 = vmatpush1.bf16.msra.mxu0 %v395
    %437 = vmatprep.subr.bf16.mxu0 0
    %438 = vmatpush1.bf16.msra.mxu0 %v396
    %439 = vmatprep.subr.bf16.mxu0 0
    %440 = vmatpush1.bf16.msra.mxu0 %v397
    %441 = vmatprep.subr.bf16.mxu0 0
    %442 = vmatpush1.bf16.msra.mxu0 %v398
    %443 = vmatprep.subr.bf16.mxu0 0
    %444 = vmatpush1.bf16.msra.mxu0 %v399
    %445 = vmatprep.subr.bf16.mxu0 0
    %446 = vmatpush1.bf16.msra.mxu0 %v400
    %447 = vmatprep.subr.bf16.mxu0 0
    %448 = vmatpush1.bf16.msra.mxu0 %v401
    %449 = vmatprep.subr.bf16.mxu0 0
    %450 = vmatpush1.bf16.msra.mxu0 %v402
    %451 = vmatprep.mubr.bf16.mxu0 %v281
    %452 = vmatmul.mubr.bf16.gmra.mrb[0].mxu0 %v280
    %v453 = vpop.f32.mrb[0].mxu0
    %v454 = vadd.f32 %v321, %v453
    %v455 = vpop.f32.mrb[0].mxu0
    %v456 = vpop.f32.mrb[0].mxu0
    %v457 = vadd.f32 %v321, %v456
    %v458 = vpop.f32.mrb[0].mxu0
    %459 = vmatprep.mubr.bf16.mxu0 %v283
    %460 = vmatmul.mubr.bf16.gmra.mrb[0].mxu0 %v282
    %v461 = vpop.f32.mrb[0].mxu0
    %v462 = vadd.f32 %v321, %v461
    %v463 = vpop.f32.mrb[0].mxu0
    %v464 = vpop.f32.mrb[0].mxu0
    %v465 = vadd.f32 %v321, %v464
    %v466 = vpop.f32.mrb[0].mxu0
    %467 = vdwg.mxu0
    %468 = vst [vmem:[#allocation8] sm:$0xff] %v454
    %469 = vst [vmem:[#allocation8 + $0x8] sm:$0xff] %v457
    %470 = vst [vmem:[#allocation8 + $0x10] sm:$0xff] %v462
    %471 = vst [vmem:[#allocation8 + $0x18] sm:$0xff] %v465
    // Predicated region
    $region34: #{tpu_custom_call.1} parent=1 // pred_check
      _
    $region35: #{tpu_custom_call.1} parent=1 // pred_check_branch
      %473 = sbr.rel (0) target = $region37
    $region36: #{tpu_custom_call.1} parent=1 // pred_region
      %s475 = ssub.s32 512, 512
      %476 = vsyncadd [#allocation4], %s475
      %s477 = sshll.u32 [#allocation8], 4
      %s478 = int_to_ptr.vmem [resolvable:$true] %s477
      %483 = dma.vmem_to_hbm [thread:$0]  %s478, 512, %s5, [#allocation4], 128, 128, 8
    $region37: #{tpu_custom_call.1} parent=1 // pred_fallthru
      _
    // Predicated region
    $region38: #{tpu_custom_call.1} parent=1 // pred_check
      _
    $region39: #{tpu_custom_call.1} parent=1 // pred_check_branch
      %485 = sbr.rel (0) target = $region41
    $region40: #{tpu_custom_call.1} parent=1 // pred_region
      %486 = dma.done [#allocation4], 512
    $region41: #{tpu_custom_call.1} parent=1 // pred_fallthru
      _
    %487 = vsyncpa [#allocation3], 1
    %488 = vsyncpa [#allocation6], 1
    %489 = vsyncpa [#allocation4], 1

</llo_original>
